<compile_context>
chip_gen: v5e
topology: v5e:2x2
jax: 0.10.0
libtpu: 0.0.40
codegen_flags: <defaults>
</compile_context>

<pallas_src>
import jax
import jax.numpy as jnp
from jax.experimental import pallas as pl
from jax.experimental.pallas import tpu as pltpu

EPS = 1e-5
LANE = 128


def _pad_to(v, mult):
    return ((v + mult - 1) // mult) * mult


def _largest_divisor_leq(n, limit):
    limit = max(1, min(n, limit))
    for d in range(limit, 0, -1):
        if n % d == 0:
            return d
    return 1


def _vmem_limit_bytes():
    try:
        cap = int(pltpu.get_tpu_info().vmem_capacity_bytes)
    except Exception:
        cap = 64 * 1024 * 1024          # conservative (v7x-sized) fallback
    return int(min(cap * 3 // 4, 100 * 1024 * 1024))


def transition_forward(x_nchw, gamma, beta, w_conv):
    """Pallas implementation of Transition.forward.

    x_nchw : (N, Cin, H, W) float32   (PyTorch layout, H and W even)
    gamma  : (Cin,)                    BN weight
    beta   : (Cin,)                    BN bias
    w_conv : (Cout, Cin)               1x1 conv weight (torch weight[:, :, 0, 0])
    returns: (N, Cout, H//2, W//2) float32
    """
    n, cin, h, w = x_nchw.shape
    assert h % 2 == 0 and w % 2 == 0, "AvgPool2d(2,2) assumes even H and W"
    cout = w_conv.shape[0]
    ho, wo = h // 2, w // 2
    m = n * h * w
    mout = n * ho * wo
    cpad = _pad_to(cin, LANE)
    copad = _pad_to(cout, LANE)
    vmem_limit = _vmem_limit_bytes()

    # ---- single wrapper materialization: NCHW -> NHWC, channel pad, bf16 cast ----
    x_nhwc = jnp.transpose(x_nchw, (0, 2, 3, 1)).astype(jnp.bfloat16)
    if cpad != cin:
        x_nhwc = jnp.pad(x_nhwc, ((0, 0), (0, 0), (0, 0), (0, cpad - cin)))
    nrp = n * ho                                          # number of H row-pairs
    x4 = x_nhwc.reshape(nrp, 2, w, cpad)                  # free reshape

    # ---- pass-1 tiling: row-pair tiles sized for ~4 MiB input blocks ----
    rp_bytes = 2 * w * cpad * 2                           # bf16 bytes per row-pair
    tr_target = max(1, min(nrp, (4 << 20) // rp_bytes))
    tr = _largest_divisor_leq(nrp, tr_target)
    if tr < max(1, tr_target // 8):                       # divisor too small -> pad instead
        tr = tr_target
    tiles = -(-nrp // tr)
    nrp_pad = tiles * tr
    if nrp_pad != nrp:
        x4 = jnp.pad(x4, ((0, nrp_pad - nrp), (0, 0), (0, 0), (0, 0)))
    groups = 2 if (tiles >= 2 and tiles % 2 == 0) else 1  # v7x: one group per TensorCore
    half = tiles // groups

    # ------------------------------------------------------------------ pass 1 ----
    def stats_pool_kernel(x_ref, sum_ref, sumsq_ref, rowsum_ref):
        @pl.when(pl.program_id(1) == 0)
        def _():
            sum_ref[...] = jnp.zeros_like(sum_ref)
            sumsq_ref[...] = jnp.zeros_like(sumsq_ref)

        x0 = x_ref[:, 0, :, :].astype(jnp.float32)        # (tr, W, Cpad)
        x1 = x_ref[:, 1, :, :].astype(jnp.float32)
        row = x0 + x1                                     # H-pair sum (half the pool)
        sq = x0 * x0 + x1 * x1
        # stats partials: leading-axis adds (VPU), then one sublane reduce (XLU)
        s = jnp.sum(jnp.sum(row, axis=0), axis=0, keepdims=True)    # (1, Cpad)
        ss = jnp.sum(jnp.sum(sq, axis=0), axis=0, keepdims=True)
        sum_ref[...] = sum_ref[...] + s.reshape(1, 1, cpad)
        sumsq_ref[...] = sumsq_ref[...] + ss.reshape(1, 1, cpad)
        rowsum_ref[...] = row.astype(jnp.bfloat16)

    sum_arr, sumsq_arr, rowsum = pl.pallas_call(
        stats_pool_kernel,
        out_shape=(jax.ShapeDtypeStruct((groups, 8, cpad), jnp.float32),
                   jax.ShapeDtypeStruct((groups, 8, cpad), jnp.float32),
                   jax.ShapeDtypeStruct((nrp_pad, w, cpad), jnp.bfloat16)),
        grid_spec=pltpu.PrefetchScalarGridSpec(
            num_scalar_prefetch=0,
            grid=(groups, half),
            in_specs=[pl.BlockSpec((tr, 2, w, cpad),
                                   lambda p, i: (p * half + i, 0, 0, 0))],
            out_specs=(pl.BlockSpec((1, 8, cpad), lambda p, i: (p, 0, 0)),
                       pl.BlockSpec((1, 8, cpad), lambda p, i: (p, 0, 0)),
                       pl.BlockSpec((tr, w, cpad),
                                    lambda p, i: (p * half + i, 0, 0)))),
        compiler_params=pltpu.CompilerParams(
            dimension_semantics=("parallel", "arbitrary"),
            vmem_limit_bytes=vmem_limit),
    )(x4)

    # ---- fold BN affine + 2x2 pool scale into the 1x1 conv (tiny wrapper math) ----
    sum_x = jnp.sum(sum_arr[:, 0, :], axis=0)             # (Cpad,)
    sum_xx = jnp.sum(sumsq_arr[:, 0, :], axis=0)
    mean = sum_x / m                                      # divide by true M
    var = jnp.maximum(sum_xx / m - mean * mean, 0.0)      # biased (training-mode) var
    g = jnp.zeros((cpad,), jnp.float32).at[:cin].set(gamma.astype(jnp.float32))
    b = jnp.zeros((cpad,), jnp.float32).at[:cin].set(beta.astype(jnp.float32))
    scale = g * jax.lax.rsqrt(var + EPS)
    shift = b - mean * scale
    w_mat = jnp.zeros((cpad, copad), jnp.float32).at[:cin, :cout].set(
        jnp.transpose(w_conv, (1, 0)).astype(jnp.float32))
    w_half = scale[:, None] * w_mat                       # (Cpad, Copad)
    # W-pair average folded into the contraction: [x_even | x_odd] @ 0.25*[[W],[W]]
    w2 = (0.25 * jnp.concatenate([w_half, w_half], axis=0)).astype(jnp.bfloat16)
    bias_eff = shift[None, :] @ w_mat                     # (1, Copad) f32

    # ------------------------------------------------------------------ pass 2 ----
    mout_full = nrp_pad * wo
    pooled2 = rowsum.reshape(mout_full, 2 * cpad)         # free reshape (contiguous)
    tm2 = min(512, _pad_to(mout_full, 8))
    mout_pad2 = _pad_to(mout_full, tm2)
    if mout_pad2 != mout_full:
        pooled2 = jnp.pad(pooled2, ((0, mout_pad2 - mout_full), (0, 0)))

    def conv_kernel(p_ref, w_ref, b_ref, o_ref):
        o_ref[...] = jnp.dot(p_ref[...], w_ref[...],
                             preferred_element_type=jnp.float32) + b_ref[...]

    out2d = pl.pallas_call(
        conv_kernel,
        out_shape=jax.ShapeDtypeStruct((mout_pad2, copad), jnp.float32),
        grid_spec=pltpu.PrefetchScalarGridSpec(
            num_scalar_prefetch=0,
            grid=(mout_pad2 // tm2,),
            in_specs=[pl.BlockSpec((tm2, 2 * cpad), lambda i: (i, 0)),
                      pl.BlockSpec((2 * cpad, copad), lambda i: (0, 0)),
                      pl.BlockSpec((1, copad), lambda i: (0, 0))],
            out_specs=pl.BlockSpec((tm2, copad), lambda i: (i, 0))),
        compiler_params=pltpu.CompilerParams(
            dimension_semantics=("parallel",),            # independent M tiles
            vmem_limit_bytes=vmem_limit),
    )(pooled2, w2, bias_eff)

    # ---- strip padding, (Mout, Cout) -> NHWC -> NCHW (small output tensors) ----
    out2d = out2d[:mout, :cout]
    return jnp.transpose(out2d.reshape(n, ho, wo, cout), (0, 3, 1, 2))


def _reference_forward(x_nchw, gamma, beta, w_conv):
    """Pure-JAX reference matching nn.Sequential(BN2d, Conv2d 1x1 no-bias, AvgPool2d(2,2))."""
    mean = jnp.mean(x_nchw, axis=(0, 2, 3), keepdims=True)
    var = jnp.mean((x_nchw - mean) ** 2, axis=(0, 2, 3), keepdims=True)
    xn = (x_nchw - mean) * jax.lax.rsqrt(var + EPS)
    xn = xn * gamma[None, :, None, None] + beta[None, :, None, None]
    y = jnp.einsum("nchw,oc->nohw", xn, w_conv)
    n, co, hh, ww = y.shape
    return y.reshape(n, co, hh // 2, 2, ww // 2, 2).mean(axis=(3, 5))


if __name__ == "__main__":
    key = jax.random.PRNGKey(0)
    k_x, k_g, k_b, k_w = jax.random.split(key, 4)

    N, Cin, H, W = 2, 4, 16, 16
    Cout = 2  # DenseNet transition typically reduces channels

    x = jax.random.normal(k_x, (N, Cin, H, W), dtype=jnp.float32)
    gamma = 1.0 + 0.1 * jax.random.normal(k_g, (Cin,), dtype=jnp.float32)
    beta = 0.1 * jax.random.normal(k_b, (Cin,), dtype=jnp.float32)
    w_conv = jax.random.normal(k_w, (Cout, Cin), dtype=jnp.float32) / jnp.sqrt(Cin)

    out = jax.block_until_ready(jax.jit(transition_forward)(x, gamma, beta, w_conv))
    ref = jax.block_until_ready(_reference_forward(x, gamma, beta, w_conv))

    assert out.shape == (N, Cout, H // 2, W // 2), out.shape
    max_err = float(jnp.max(jnp.abs(out - ref)))
    # bf16 HBM carry + bf16 MXU operands (f32 accumulation) -> loosened tolerance
    # versus the all-f32 reference.
    assert jnp.allclose(out, ref, atol=3e-2, rtol=3e-2), max_err
    print("KERNEL_OK")
</pallas_src>

<mosaic_0001>
module attributes {stable_mosaic.version = 11 : i64} {
  func.func @stats_pool_kernel(%arg0: i32, %arg1: i32, %arg2: memref<16x2x16x128xbf16, #tpu.memory_space<vmem>>, %arg3: memref<1x8x128xf32, #tpu.memory_space<vmem>>, %arg4: memref<1x8x128xf32, #tpu.memory_space<vmem>>, %arg5: memref<16x16x128xbf16, #tpu.memory_space<vmem>>) attributes {dimension_semantics = [#tpu.dimension_semantics<parallel>, #tpu.dimension_semantics<arbitrary>], iteration_bounds = array<i64: 1, 1>, scalar_prefetch = 0 : i64, scratch_operands = 0 : i64, tpu.core_type = #tpu.core_type<tc>, window_params = [{transform_indices = @transform_0, window_bounds = array<i64: 16, 2, 16, 128>}, {transform_indices = @transform_1, window_bounds = array<i64: 1, 8, 128>}, {transform_indices = @transform_2, window_bounds = array<i64: 1, 8, 128>}, {transform_indices = @transform_3, window_bounds = array<i64: 16, 16, 128>}]} {
    %c0_i32 = arith.constant 0 : i32
    %0 = arith.cmpi eq, %arg1, %c0_i32 : i32
    %1 = arith.extui %0 : i1 to i32
    %c0_i32_0 = arith.constant 0 : i32
    %2 = arith.cmpi ne, %1, %c0_i32_0 : i32
    scf.if %2 {
      %cst_25 = arith.constant 0.000000e+00 : f32
      %31 = vector.broadcast %cst_25 : f32 to vector<1x8x128xf32>
      %c0_26 = arith.constant 0 : index
      %c0_27 = arith.constant 0 : index
      %c0_28 = arith.constant 0 : index
      %32 = vector.load %arg3[%c0_26, %c0_27, %c0_28] : memref<1x8x128xf32, #tpu.memory_space<vmem>>, vector<1x8x128xf32>
      tpu.vector_store %arg3[%c0_26, %c0_27, %c0_28], %31 {strides = array<i32>} : memref<1x8x128xf32, #tpu.memory_space<vmem>>, vector<1x8x128xf32>,
      %cst_29 = arith.constant 0.000000e+00 : f32
      %33 = vector.broadcast %cst_29 : f32 to vector<1x8x128xf32>
      %c0_30 = arith.constant 0 : index
      %c0_31 = arith.constant 0 : index
      %c0_32 = arith.constant 0 : index
      %34 = vector.load %arg4[%c0_30, %c0_31, %c0_32] : memref<1x8x128xf32, #tpu.memory_space<vmem>>, vector<1x8x128xf32>
      tpu.vector_store %arg4[%c0_30, %c0_31, %c0_32], %33 {strides = array<i32>} : memref<1x8x128xf32, #tpu.memory_space<vmem>>, vector<1x8x128xf32>,
    } else {
    }
    %c0 = arith.constant 0 : index
    %c0_1 = arith.constant 0 : index
    %c0_2 = arith.constant 0 : index
    %c0_3 = arith.constant 0 : index
    %3 = vector.load %arg2[%c0, %c0_1, %c0_2, %c0_3] : memref<16x2x16x128xbf16, #tpu.memory_space<vmem>>, vector<16x1x16x128xbf16>
    %4 = vector.shape_cast %3 : vector<16x1x16x128xbf16> to vector<16x16x128xbf16>
    %5 = arith.extf %4 : vector<16x16x128xbf16> to vector<16x16x128xf32>
    %c0_4 = arith.constant 0 : index
    %c1 = arith.constant 1 : index
    %c0_5 = arith.constant 0 : index
    %c0_6 = arith.constant 0 : index
    %6 = vector.load %arg2[%c0_4, %c1, %c0_5, %c0_6] : memref<16x2x16x128xbf16, #tpu.memory_space<vmem>>, vector<16x1x16x128xbf16>
    %7 = vector.shape_cast %6 : vector<16x1x16x128xbf16> to vector<16x16x128xbf16>
    %8 = arith.extf %7 : vector<16x16x128xbf16> to vector<16x16x128xf32>
    %9 = arith.addf %5, %8 : vector<16x16x128xf32>
    %10 = arith.mulf %5, %5 : vector<16x16x128xf32>
    %11 = arith.mulf %8, %8 : vector<16x16x128xf32>
    %12 = arith.addf %10, %11 : vector<16x16x128xf32>
    %cst = arith.constant dense<0.000000e+00> : vector<16x128xf32>
    %13 = vector.multi_reduction <add>, %9, %cst [0] : vector<16x16x128xf32> to vector<16x128xf32>
    %cst_7 = arith.constant dense<0.000000e+00> : vector<128xf32>
    %14 = vector.multi_reduction <add>, %13, %cst_7 [0] : vector<16x128xf32> to vector<128xf32>
    %15 = vector.shape_cast %14 : vector<128xf32> to vector<1x128xf32>
    %cst_8 = arith.constant dense<0.000000e+00> : vector<16x128xf32>
    %16 = vector.multi_reduction <add>, %12, %cst_8 [0] : vector<16x16x128xf32> to vector<16x128xf32>
    %cst_9 = arith.constant dense<0.000000e+00> : vector<128xf32>
    %17 = vector.multi_reduction <add>, %16, %cst_9 [0] : vector<16x128xf32> to vector<128xf32>
    %18 = vector.shape_cast %17 : vector<128xf32> to vector<1x128xf32>
    %c0_10 = arith.constant 0 : index
    %c0_11 = arith.constant 0 : index
    %c0_12 = arith.constant 0 : index
    %19 = vector.load %arg3[%c0_10, %c0_11, %c0_12] : memref<1x8x128xf32, #tpu.memory_space<vmem>>, vector<1x8x128xf32>
    %20 = vector.shape_cast %15 : vector<1x128xf32> to vector<1x1x128xf32>
    %21 = vector.broadcast %20 : vector<1x1x128xf32> to vector<1x8x128xf32>
    %22 = arith.addf %19, %21 : vector<1x8x128xf32>
    %c0_13 = arith.constant 0 : index
    %c0_14 = arith.constant 0 : index
    %c0_15 = arith.constant 0 : index
    %23 = vector.load %arg3[%c0_13, %c0_14, %c0_15] : memref<1x8x128xf32, #tpu.memory_space<vmem>>, vector<1x8x128xf32>
    tpu.vector_store %arg3[%c0_13, %c0_14, %c0_15], %22 {strides = array<i32>} : memref<1x8x128xf32, #tpu.memory_space<vmem>>, vector<1x8x128xf32>,
    %c0_16 = arith.constant 0 : index
    %c0_17 = arith.constant 0 : index
    %c0_18 = arith.constant 0 : index
    %24 = vector.load %arg4[%c0_16, %c0_17, %c0_18] : memref<1x8x128xf32, #tpu.memory_space<vmem>>, vector<1x8x128xf32>
    %25 = vector.shape_cast %18 : vector<1x128xf32> to vector<1x1x128xf32>
    %26 = vector.broadcast %25 : vector<1x1x128xf32> to vector<1x8x128xf32>
    %27 = arith.addf %24, %26 : vector<1x8x128xf32>
    %c0_19 = arith.constant 0 : index
    %c0_20 = arith.constant 0 : index
    %c0_21 = arith.constant 0 : index
    %28 = vector.load %arg4[%c0_19, %c0_20, %c0_21] : memref<1x8x128xf32, #tpu.memory_space<vmem>>, vector<1x8x128xf32>
    tpu.vector_store %arg4[%c0_19, %c0_20, %c0_21], %27 {strides = array<i32>} : memref<1x8x128xf32, #tpu.memory_space<vmem>>, vector<1x8x128xf32>,
    %29 = arith.truncf %9 : vector<16x16x128xf32> to vector<16x16x128xbf16>
    %c0_22 = arith.constant 0 : index
    %c0_23 = arith.constant 0 : index
    %c0_24 = arith.constant 0 : index
    %30 = vector.load %arg5[%c0_22, %c0_23, %c0_24] : memref<16x16x128xbf16, #tpu.memory_space<vmem>>, vector<16x16x128xbf16>
    tpu.vector_store %arg5[%c0_22, %c0_23, %c0_24], %29 {strides = array<i32>} : memref<16x16x128xbf16, #tpu.memory_space<vmem>>, vector<16x16x128xbf16>,
    return
  }
  func.func @transform_0(%arg0: i32, %arg1: i32) -> (i32, i32, i32, i32) {
    %c1_i32 = arith.constant 1 : i32
    %0 = arith.muli %arg0, %c1_i32 : i32
    %1 = arith.addi %0, %arg1 : i32
    %c0_i32 = arith.constant 0 : i32
    %c0_i32_0 = arith.constant 0 : i32
    %c0_i32_1 = arith.constant 0 : i32
    %c0_i32_2 = arith.constant 0 : i32
    return %1, %c0_i32, %c0_i32_0, %c0_i32_1 : i32, i32, i32, i32
  }
  func.func @transform_1(%arg0: i32, %arg1: i32) -> (i32, i32, i32) {
    %c0_i32 = arith.constant 0 : i32
    %c0_i32_0 = arith.constant 0 : i32
    %c0_i32_1 = arith.constant 0 : i32
    return %arg0, %c0_i32, %c0_i32_0 : i32, i32, i32
  }
  func.func @transform_2(%arg0: i32, %arg1: i32) -> (i32, i32, i32) {
    %c0_i32 = arith.constant 0 : i32
    %c0_i32_0 = arith.constant 0 : i32
    %c0_i32_1 = arith.constant 0 : i32
    return %arg0, %c0_i32, %c0_i32_0 : i32, i32, i32
  }
  func.func @transform_3(%arg0: i32, %arg1: i32) -> (i32, i32, i32) {
    %c1_i32 = arith.constant 1 : i32
    %0 = arith.muli %arg0, %c1_i32 : i32
    %1 = arith.addi %0, %arg1 : i32
    %c0_i32 = arith.constant 0 : i32
    %c0_i32_0 = arith.constant 0 : i32
    %c0_i32_1 = arith.constant 0 : i32
    return %1, %c0_i32, %c0_i32_0 : i32, i32, i32
  }
}

module attributes {stable_mosaic.version = 11 : i64} {
  func.func @conv_kernel(%arg0: i32, %arg1: memref<128x256xbf16, #tpu.memory_space<vmem>>, %arg2: memref<256x128xbf16, #tpu.memory_space<vmem>>, %arg3: memref<1x128xf32, #tpu.memory_space<vmem>>, %arg4: memref<128x128xf32, #tpu.memory_space<vmem>>) attributes {dimension_semantics = [#tpu.dimension_semantics<parallel>], iteration_bounds = array<i64: 1>, scalar_prefetch = 0 : i64, scratch_operands = 0 : i64, tpu.core_type = #tpu.core_type<tc>, window_params = [{transform_indices = @transform_0, window_bounds = array<i64: 128, 256>}, {pipeline_mode = #tpu.pipeline_mode<synchronous>, transform_indices = @transform_1, window_bounds = array<i64: 256, 128>}, {pipeline_mode = #tpu.pipeline_mode<synchronous>, transform_indices = @transform_2, window_bounds = array<i64: 1, 128>}, {transform_indices = @transform_3, window_bounds = array<i64: 128, 128>}]} {
    %c0 = arith.constant 0 : index
    %c0_0 = arith.constant 0 : index
    %0 = vector.load %arg1[%c0, %c0_0] : memref<128x256xbf16, #tpu.memory_space<vmem>>, vector<128x256xbf16>
    %c0_1 = arith.constant 0 : index
    %c0_2 = arith.constant 0 : index
    %1 = vector.load %arg2[%c0_1, %c0_2] : memref<256x128xbf16, #tpu.memory_space<vmem>>, vector<256x128xbf16>
    %cst = arith.constant dense<0.000000e+00> : vector<128x128xf32>
    %2 = tpu.matmul %0, %1, %cst {dimension_numbers = #tpu.dot_dimension_numbers<[1], [0], [0], [1], [0, 0, 1, 1], [], []>} : vector<128x256xbf16>, vector<256x128xbf16>, vector<128x128xf32> -> vector<128x128xf32>
    %c0_3 = arith.constant 0 : index
    %c0_4 = arith.constant 0 : index
    %3 = vector.load %arg3[%c0_3, %c0_4] : memref<1x128xf32, #tpu.memory_space<vmem>>, vector<1x128xf32>
    %4 = vector.broadcast %3 : vector<1x128xf32> to vector<128x128xf32>
    %5 = arith.addf %2, %4 : vector<128x128xf32>
    %c0_5 = arith.constant 0 : index
    %c0_6 = arith.constant 0 : index
    %6 = vector.load %arg4[%c0_5, %c0_6] : memref<128x128xf32, #tpu.memory_space<vmem>>, vector<128x128xf32>
    tpu.vector_store %arg4[%c0_5, %c0_6], %5 {strides = array<i32>} : memref<128x128xf32, #tpu.memory_space<vmem>>, vector<128x128xf32>,
    return
  }
  func.func @transform_0(%arg0: i32) -> (i32, i32) {
    %c0_i32 = arith.constant 0 : i32
    %c0_i32_0 = arith.constant 0 : i32
    return %arg0, %c0_i32 : i32, i32
  }
  func.func @transform_1(%arg0: i32) -> (i32, i32) {
    %c0_i32 = arith.constant 0 : i32
    %c0_i32_0 = arith.constant 0 : i32
    %c0_i32_1 = arith.constant 0 : i32
    return %c0_i32, %c0_i32_0 : i32, i32
  }
  func.func @transform_2(%arg0: i32) -> (i32, i32) {
    %c0_i32 = arith.constant 0 : i32
    %c0_i32_0 = arith.constant 0 : i32
    %c0_i32_1 = arith.constant 0 : i32
    return %c0_i32, %c0_i32_0 : i32, i32
  }
  func.func @transform_3(%arg0: i32) -> (i32, i32) {
    %c0_i32 = arith.constant 0 : i32
    %c0_i32_0 = arith.constant 0 : i32
    return %arg0, %c0_i32 : i32, i32
  }
}

</mosaic_0001>

<llo_original>
// kernel: transition_forward.2
$region0: #{transition_forward.2}
  #allocation0 [shape = 'u32[]', space=smem, size = 0x4, offset = 0x4, fixed_abs, tag = 'smem constant byte address 0x4 - core index']
  #allocation1 [shape = 'u32[72,128]{1,0:T(1,128)}', space=vmem, size = 0x9000, scoped, tag = 'internal scratch']
  %s0 = inlined_call_operand.vmem [shape: bf16[16,2,16,128], index: 0, kind: input, shape index: {}]
  %s1 = inlined_call_operand.vmem [shape: f32[1,8,128], index: 1, kind: output, shape index: {0}]
  %s2 = inlined_call_operand.vmem [shape: f32[1,8,128], index: 2, kind: output, shape index: {1}]
  %s3 = inlined_call_operand.vmem [shape: bf16[16,16,128], index: 3, kind: output, shape index: {2}]
  %4 = xla_tuple %s1, %s2, %s3
  %s5 = sld [smem:[#allocation0]]
  $region34: #{transition_forward.2} parent=0
    _
  %s7 = ssub.s32 1, %s5
  %s8 = scalar_select 0, %s7, %s5
  // Predicated region
  $region2: #{transition_forward.2} parent=0 // pred_check
    _
  $region3: #{transition_forward.2} parent=0 // pred_check_branch
    %10 = sbr.rel (0) target = $region5
  $region4: #{transition_forward.2} parent=0 // pred_region
    %s11 = sadd.s32 0, 0
    %s12 = smul.u32 16, %s11
    %p13 = scmp.lt.s32.totalorder %s12, 15
    %s14 = scalar_select %p13, %s12, 15
    %s15 = smul.addr %s14, 4
    %s16 = smul.addr %s15, 4
    %s17 = scalar_lea.vmem %s0, %s16
    %s18 = sadd.s32 0, 0
    %s19 = smul.u32 16, %s18
  $region5: #{transition_forward.2} parent=0 // pred_fallthru
    _
  %s20 = sadd.s32 0, 0
  %s21 = smul.u32 16, %s20
  %p22 = scmp.lt.s32.totalorder %s21, 15
  %s23 = scalar_select %p22, %s21, 15
  %s24 = smul.addr %s23, 4
  %s25 = smul.addr %s24, 4
  %s26 = scalar_lea.vmem %s0, %s25
  %s27 = sadd.s32 0, 0
  %s28 = smul.u32 16, %s27
  %p29 = scmp.lt.s32.totalorder %s28, 15
  %s30 = scalar_select %p29, %s28, 15
  %s31 = smul.addr %s30, 2
  %s32 = smul.addr %s31, 4
  %s33 = scalar_lea.vmem %s3, %s32
  %s34 = sadd.s32 0, 0
  %s35 = smul.u32 16, %s34
  %p36 = scmp.lt.s32.totalorder %s35, 15
  %s37 = scalar_select %p36, %s35, 15
  %s38 = smul.addr %s37, 4
  %s39 = smul.addr %s38, 4
  %s40 = scalar_lea.vmem %s0, %s39
  %s41 = sadd.s32 0, 0
  %s42 = smul.u32 16, %s41
  %s43 = sadd.s32 0, 0
  %s44 = smul.u32 16, %s43
  %p45 = scmp.lt.s32.totalorder %s44, 15
  %s46 = scalar_select %p45, %s44, 15
  %s47 = smul.addr %s46, 2
  %s48 = smul.addr %s47, 4
  %s49 = scalar_lea.vmem %s3, %s48
  %s50 = sadd.s32 0, 0
  %s51 = smul.u32 16, %s50
  %p52 = scmp.eq.s32.totalorder 0, 0
  // Predicated region
  $region6: #{transition_forward.2} parent=0 // pred_check
    %p53 = pneg %p52
  $region7: #{transition_forward.2} parent=0 // pred_check_branch
    %55 = sbr.rel (%p53) target = $region9
  $region8: #{transition_forward.2} parent=0 // pred_region
    %56 = vst [vmem:[%s1] sm:$0xff] 0.0
    %57 = vst [vmem:[%s2] sm:$0xff] 0.0
  $region9: #{transition_forward.2} parent=0 // pred_fallthru
    _
  %v58 = vld [vmem:[%s40] sm:$0xf]
  %v59 = vld [vmem:[%s40 + $0x4] sm:$0xf]
  %v60 = vld [vmem:[%s40 + $0x10] sm:$0xf]
  %v61 = vld [vmem:[%s40 + $0x14] sm:$0xf]
  %v62 = vld [vmem:[%s40 + $0x20] sm:$0xf]
  %v63 = vld [vmem:[%s40 + $0x24] sm:$0xf]
  %v64 = vld [vmem:[%s40 + $0x30] sm:$0xf]
  %v65 = vld [vmem:[%s40 + $0x34] sm:$0xf]
  %v66 = vld [vmem:[%s40 + $0x40] sm:$0xf]
  %v67 = vld [vmem:[%s40 + $0x44] sm:$0xf]
  %v68 = vld [vmem:[%s40 + $0x50] sm:$0xf]
  %v69 = vld [vmem:[%s40 + $0x54] sm:$0xf]
  %v70 = vld [vmem:[%s40 + $0x60] sm:$0xf]
  %v71 = vld [vmem:[%s40 + $0x64] sm:$0xf]
  %v72 = vld [vmem:[%s40 + $0x70] sm:$0xf]
  %v73 = vld [vmem:[%s40 + $0x74] sm:$0xf]
  %v74 = vld [vmem:[%s40 + $0x80] sm:$0xf]
  %v75 = vld [vmem:[%s40 + $0x84] sm:$0xf]
  %v76 = vld [vmem:[%s40 + $0x90] sm:$0xf]
  %v77 = vld [vmem:[%s40 + $0x94] sm:$0xf]
  %v78 = vld [vmem:[%s40 + $0xa0] sm:$0xf]
  %v79 = vld [vmem:[%s40 + $0xa4] sm:$0xf]
  %v80 = vld [vmem:[%s40 + $0xb0] sm:$0xf]
  %v81 = vld [vmem:[%s40 + $0xb4] sm:$0xf]
  %v82 = vld [vmem:[%s40 + $0xc0] sm:$0xf]
  %v83 = vld [vmem:[%s40 + $0xc4] sm:$0xf]
  %v84 = vld [vmem:[%s40 + $0xd0] sm:$0xf]
  %v85 = vld [vmem:[%s40 + $0xd4] sm:$0xf]
  %v86 = vld [vmem:[%s40 + $0xe0] sm:$0xf]
  %v87 = vld [vmem:[%s40 + $0xe4] sm:$0xf]
  %v88 = vld [vmem:[%s40 + $0xf0] sm:$0xf]
  %v89 = vld [vmem:[%s40 + $0xf4] sm:$0xf]
  %v90 = vunpack.c.l.bf16 %v58
  %v91 = vunpack.c.l.bf16 %v59
  %v92 = vunpack.c.l.bf16 %v60
  %v93 = vunpack.c.l.bf16 %v61
  %v94 = vunpack.c.l.bf16 %v62
  %v95 = vunpack.c.l.bf16 %v63
  %v96 = vunpack.c.l.bf16 %v64
  %v97 = vunpack.c.l.bf16 %v65
  %v98 = vunpack.c.l.bf16 %v66
  %v99 = vunpack.c.l.bf16 %v67
  %v100 = vunpack.c.l.bf16 %v68
  %v101 = vunpack.c.l.bf16 %v69
  %v102 = vunpack.c.l.bf16 %v70
  %v103 = vunpack.c.l.bf16 %v71
  %v104 = vunpack.c.l.bf16 %v72
  %v105 = vunpack.c.l.bf16 %v73
  %v106 = vunpack.c.l.bf16 %v74
  %v107 = vunpack.c.l.bf16 %v75
  %v108 = vunpack.c.l.bf16 %v76
  %v109 = vunpack.c.l.bf16 %v77
  %v110 = vunpack.c.l.bf16 %v78
  %v111 = vunpack.c.l.bf16 %v79
  %v112 = vunpack.c.l.bf16 %v80
  %v113 = vunpack.c.l.bf16 %v81
  %v114 = vunpack.c.l.bf16 %v82
  %v115 = vunpack.c.l.bf16 %v83
  %v116 = vunpack.c.l.bf16 %v84
  %v117 = vunpack.c.l.bf16 %v85
  %v118 = vunpack.c.l.bf16 %v86
  %v119 = vunpack.c.l.bf16 %v87
  %v120 = vunpack.c.l.bf16 %v88
  %v121 = vunpack.c.l.bf16 %v89
  %s122 = scalar_lea.vmem %s40, 8
  %v123 = vld [vmem:[%s122] sm:$0xf]
  %v124 = vld [vmem:[%s122 + $0x4] sm:$0xf]
  %v125 = vld [vmem:[%s122 + $0x10] sm:$0xf]
  %v126 = vld [vmem:[%s122 + $0x14] sm:$0xf]
  %v127 = vld [vmem:[%s122 + $0x20] sm:$0xf]
  %v128 = vld [vmem:[%s122 + $0x24] sm:$0xf]
  %v129 = vld [vmem:[%s122 + $0x30] sm:$0xf]
  %v130 = vld [vmem:[%s122 + $0x34] sm:$0xf]
  %v131 = vld [vmem:[%s122 + $0x40] sm:$0xf]
  %v132 = vld [vmem:[%s122 + $0x44] sm:$0xf]
  %v133 = vld [vmem:[%s122 + $0x50] sm:$0xf]
  %v134 = vld [vmem:[%s122 + $0x54] sm:$0xf]
  %v135 = vld [vmem:[%s122 + $0x60] sm:$0xf]
  %v136 = vld [vmem:[%s122 + $0x64] sm:$0xf]
  %v137 = vld [vmem:[%s122 + $0x70] sm:$0xf]
  %v138 = vld [vmem:[%s122 + $0x74] sm:$0xf]
  %v139 = vld [vmem:[%s122 + $0x80] sm:$0xf]
  %v140 = vld [vmem:[%s122 + $0x84] sm:$0xf]
  %v141 = vld [vmem:[%s122 + $0x90] sm:$0xf]
  %v142 = vld [vmem:[%s122 + $0x94] sm:$0xf]
  %v143 = vld [vmem:[%s122 + $0xa0] sm:$0xf]
  %v144 = vld [vmem:[%s122 + $0xa4] sm:$0xf]
  %v145 = vld [vmem:[%s122 + $0xb0] sm:$0xf]
  %v146 = vld [vmem:[%s122 + $0xb4] sm:$0xf]
  %v147 = vld [vmem:[%s122 + $0xc0] sm:$0xf]
  %v148 = vld [vmem:[%s122 + $0xc4] sm:$0xf]
  %v149 = vld [vmem:[%s122 + $0xd0] sm:$0xf]
  %v150 = vld [vmem:[%s122 + $0xd4] sm:$0xf]
  %v151 = vld [vmem:[%s122 + $0xe0] sm:$0xf]
  %v152 = vld [vmem:[%s122 + $0xe4] sm:$0xf]
  %v153 = vld [vmem:[%s122 + $0xf0] sm:$0xf]
  %v154 = vld [vmem:[%s122 + $0xf4] sm:$0xf]
  %v155 = vunpack.c.l.bf16 %v123
  %v156 = vunpack.c.l.bf16 %v124
  %v157 = vunpack.c.l.bf16 %v125
  %v158 = vunpack.c.l.bf16 %v126
  %v159 = vunpack.c.l.bf16 %v127
  %v160 = vunpack.c.l.bf16 %v128
  %v161 = vunpack.c.l.bf16 %v129
  %v162 = vunpack.c.l.bf16 %v130
  %v163 = vunpack.c.l.bf16 %v131
  %v164 = vunpack.c.l.bf16 %v132
  %v165 = vunpack.c.l.bf16 %v133
  %v166 = vunpack.c.l.bf16 %v134
  %v167 = vunpack.c.l.bf16 %v135
  %v168 = vunpack.c.l.bf16 %v136
  %v169 = vunpack.c.l.bf16 %v137
  %v170 = vunpack.c.l.bf16 %v138
  %v171 = vunpack.c.l.bf16 %v139
  %v172 = vunpack.c.l.bf16 %v140
  %v173 = vunpack.c.l.bf16 %v141
  %v174 = vunpack.c.l.bf16 %v142
  %v175 = vunpack.c.l.bf16 %v143
  %v176 = vunpack.c.l.bf16 %v144
  %v177 = vunpack.c.l.bf16 %v145
  %v178 = vunpack.c.l.bf16 %v146
  %v179 = vunpack.c.l.bf16 %v147
  %v180 = vunpack.c.l.bf16 %v148
  %v181 = vunpack.c.l.bf16 %v149
  %v182 = vunpack.c.l.bf16 %v150
  %v183 = vunpack.c.l.bf16 %v151
  %v184 = vunpack.c.l.bf16 %v152
  %v185 = vunpack.c.l.bf16 %v153
  %v186 = vunpack.c.l.bf16 %v154
  %v187 = vadd.f32 %v90, %v155
  %v188 = vadd.f32 %v91, %v156
  %v189 = vadd.f32 %v92, %v157
  %v190 = vadd.f32 %v93, %v158
  %v191 = vadd.f32 %v94, %v159
  %v192 = vadd.f32 %v95, %v160
  %v193 = vadd.f32 %v96, %v161
  %v194 = vadd.f32 %v97, %v162
  %v195 = vadd.f32 %v98, %v163
  %v196 = vadd.f32 %v99, %v164
  %v197 = vadd.f32 %v100, %v165
  %v198 = vadd.f32 %v101, %v166
  %v199 = vadd.f32 %v102, %v167
  %v200 = vadd.f32 %v103, %v168
  %v201 = vadd.f32 %v104, %v169
  %v202 = vadd.f32 %v105, %v170
  %v203 = vadd.f32 %v106, %v171
  %v204 = vadd.f32 %v107, %v172
  %v205 = vadd.f32 %v108, %v173
  %v206 = vadd.f32 %v109, %v174
  %v207 = vadd.f32 %v110, %v175
  %v208 = vadd.f32 %v111, %v176
  %v209 = vadd.f32 %v112, %v177
  %v210 = vadd.f32 %v113, %v178
  %v211 = vadd.f32 %v114, %v179
  %v212 = vadd.f32 %v115, %v180
  %v213 = vadd.f32 %v116, %v181
  %v214 = vadd.f32 %v117, %v182
  %v215 = vadd.f32 %v118, %v183
  %v216 = vadd.f32 %v119, %v184
  %v217 = vadd.f32 %v120, %v185
  %v218 = vadd.f32 %v121, %v186
  %v219 = vmul.f32 %v90, %v90
  %v220 = vmul.f32 %v91, %v91
  %v221 = vmul.f32 %v92, %v92
  %v222 = vmul.f32 %v93, %v93
  %v223 = vmul.f32 %v94, %v94
  %v224 = vmul.f32 %v95, %v95
  %v225 = vmul.f32 %v96, %v96
  %v226 = vmul.f32 %v97, %v97
  %v227 = vmul.f32 %v98, %v98
  %v228 = vmul.f32 %v99, %v99
  %v229 = vmul.f32 %v100, %v100
  %v230 = vmul.f32 %v101, %v101
  %v231 = vmul.f32 %v102, %v102
  %v232 = vmul.f32 %v103, %v103
  %v233 = vmul.f32 %v104, %v104
  %v234 = vmul.f32 %v105, %v105
  %v235 = vmul.f32 %v106, %v106
  %v236 = vmul.f32 %v107, %v107
  %v237 = vmul.f32 %v108, %v108
  %v238 = vmul.f32 %v109, %v109
  %v239 = vmul.f32 %v110, %v110
  %v240 = vmul.f32 %v111, %v111
  %v241 = vmul.f32 %v112, %v112
  %v242 = vmul.f32 %v113, %v113
  %v243 = vmul.f32 %v114, %v114
  %v244 = vmul.f32 %v115, %v115
  %v245 = vmul.f32 %v116, %v116
  %v246 = vmul.f32 %v117, %v117
  %v247 = vmul.f32 %v118, %v118
  %v248 = vmul.f32 %v119, %v119
  %v249 = vmul.f32 %v120, %v120
  %v250 = vmul.f32 %v121, %v121
  %v251 = vmul.f32 %v155, %v155
  %v252 = vmul.f32 %v156, %v156
  %v253 = vmul.f32 %v157, %v157
  %v254 = vmul.f32 %v158, %v158
  %v255 = vmul.f32 %v159, %v159
  %v256 = vmul.f32 %v160, %v160
  %v257 = vmul.f32 %v161, %v161
  %v258 = vmul.f32 %v162, %v162
  %v259 = vmul.f32 %v163, %v163
  %v260 = vmul.f32 %v164, %v164
  %v261 = vmul.f32 %v165, %v165
  %v262 = vmul.f32 %v166, %v166
  %v263 = vmul.f32 %v167, %v167
  %v264 = vmul.f32 %v168, %v168
  %v265 = vmul.f32 %v169, %v169
  %v266 = vmul.f32 %v170, %v170
  %v267 = vmul.f32 %v171, %v171
  %v268 = vmul.f32 %v172, %v172
  %v269 = vmul.f32 %v173, %v173
  %v270 = vmul.f32 %v174, %v174
  %v271 = vmul.f32 %v175, %v175
  %v272 = vmul.f32 %v176, %v176
  %v273 = vmul.f32 %v177, %v177
  %v274 = vmul.f32 %v178, %v178
  %v275 = vmul.f32 %v179, %v179
  %v276 = vmul.f32 %v180, %v180
  %v277 = vmul.f32 %v181, %v181
  %v278 = vmul.f32 %v182, %v182
  %v279 = vmul.f32 %v183, %v183
  %v280 = vmul.f32 %v184, %v184
  %v281 = vmul.f32 %v185, %v185
  %v282 = vmul.f32 %v186, %v186
  %v283 = vadd.f32 %v219, %v251
  %v284 = vadd.f32 %v220, %v252
  %v285 = vadd.f32 %v221, %v253
  %v286 = vadd.f32 %v222, %v254
  %v287 = vadd.f32 %v223, %v255
  %v288 = vadd.f32 %v224, %v256
  %v289 = vadd.f32 %v225, %v257
  %v290 = vadd.f32 %v226, %v258
  %v291 = vadd.f32 %v227, %v259
  %v292 = vadd.f32 %v228, %v260
  %v293 = vadd.f32 %v229, %v261
  %v294 = vadd.f32 %v230, %v262
  %v295 = vadd.f32 %v231, %v263
  %v296 = vadd.f32 %v232, %v264
  %v297 = vadd.f32 %v233, %v265
  %v298 = vadd.f32 %v234, %v266
  %v299 = vadd.f32 %v235, %v267
  %v300 = vadd.f32 %v236, %v268
  %v301 = vadd.f32 %v237, %v269
  %v302 = vadd.f32 %v238, %v270
  %v303 = vadd.f32 %v239, %v271
  %v304 = vadd.f32 %v240, %v272
  %v305 = vadd.f32 %v241, %v273
  %v306 = vadd.f32 %v242, %v274
  %v307 = vadd.f32 %v243, %v275
  %v308 = vadd.f32 %v244, %v276
  %v309 = vadd.f32 %v245, %v277
  %v310 = vadd.f32 %v246, %v278
  %v311 = vadd.f32 %v247, %v279
  %v312 = vadd.f32 %v248, %v280
  %v313 = vadd.f32 %v249, %v281
  %v314 = vadd.f32 %v250, %v282
  %v315 = vadd.f32 %v187, %v189
  %v316 = vadd.f32 %v315, %v191
  %v317 = vadd.f32 %v316, %v193
  %v318 = vadd.f32 %v317, %v195
  %v319 = vadd.f32 %v318, %v197
  %v320 = vadd.f32 %v319, %v199
  %v321 = vadd.f32 %v320, %v201
  %v322 = vadd.f32 %v321, %v203
  %v323 = vadd.f32 %v322, %v205
  %v324 = vadd.f32 %v323, %v207
  %v325 = vadd.f32 %v324, %v209
  %v326 = vadd.f32 %v325, %v211
  %v327 = vadd.f32 %v326, %v213
  %v328 = vadd.f32 %v327, %v215
  %v329 = vadd.f32 %v328, %v217
  %v330 = vadd.f32 %v188, %v190
  %v331 = vadd.f32 %v330, %v192
  %v332 = vadd.f32 %v331, %v194
  %v333 = vadd.f32 %v332, %v196
  %v334 = vadd.f32 %v333, %v198
  %v335 = vadd.f32 %v334, %v200
  %v336 = vadd.f32 %v335, %v202
  %v337 = vadd.f32 %v336, %v204
  %v338 = vadd.f32 %v337, %v206
  %v339 = vadd.f32 %v338, %v208
  %v340 = vadd.f32 %v339, %v210
  %v341 = vadd.f32 %v340, %v212
  %v342 = vadd.f32 %v341, %v214
  %v343 = vadd.f32 %v342, %v216
  %v344 = vadd.f32 %v343, %v218
  %v345 = vadd.f32 %v329, %v344
  %v346 = vrot.slane %v345, 4
  %v347 = vadd.f32 %v345, %v346
  %v348 = vrot.slane %v347, 2
  %v349 = vadd.f32 %v347, %v348
  %v350 = vrot.slane %v349, 1
  %v351 = vadd.f32 %v349, %v350
  %v352 = vadd.f32 %v283, %v285
  %v353 = vadd.f32 %v352, %v287
  %v354 = vadd.f32 %v353, %v289
  %v355 = vadd.f32 %v354, %v291
  %v356 = vadd.f32 %v355, %v293
  %v357 = vadd.f32 %v356, %v295
  %v358 = vadd.f32 %v357, %v297
  %v359 = vadd.f32 %v358, %v299
  %v360 = vadd.f32 %v359, %v301
  %v361 = vadd.f32 %v360, %v303
  %v362 = vadd.f32 %v361, %v305
  %v363 = vadd.f32 %v362, %v307
  %v364 = vadd.f32 %v363, %v309
  %v365 = vadd.f32 %v364, %v311
  %v366 = vadd.f32 %v365, %v313
  %v367 = vadd.f32 %v284, %v286
  %v368 = vadd.f32 %v367, %v288
  %v369 = vadd.f32 %v368, %v290
  %v370 = vadd.f32 %v369, %v292
  %v371 = vadd.f32 %v370, %v294
  %v372 = vadd.f32 %v371, %v296
  %v373 = vadd.f32 %v372, %v298
  %v374 = vadd.f32 %v373, %v300
  %v375 = vadd.f32 %v374, %v302
  %v376 = vadd.f32 %v375, %v304
  %v377 = vadd.f32 %v376, %v306
  %v378 = vadd.f32 %v377, %v308
  %v379 = vadd.f32 %v378, %v310
  %v380 = vadd.f32 %v379, %v312
  %v381 = vadd.f32 %v380, %v314
  %v382 = vadd.f32 %v366, %v381
  %v383 = vrot.slane %v382, 4
  %v384 = vadd.f32 %v382, %v383
  %v385 = vrot.slane %v384, 2
  %v386 = vadd.f32 %v384, %v385
  %v387 = vrot.slane %v386, 1
  %v388 = vadd.f32 %v386, %v387
  %v389 = vld [vmem:[%s1] sm:$0xff]
  %v390 = vadd.f32 %v389, %v351
  %391 = vst [vmem:[%s1] sm:$0xff] %v390
  %v392 = vld [vmem:[%s2] sm:$0xff]
  %v393 = vadd.f32 %v392, %v388
  %394 = vst [vmem:[%s2] sm:$0xff] %v393
  %v395 = vpack.c.bf16 %v187, %v187
  %v396 = vpack.c.bf16 %v188, %v188
  %v397 = vpack.c.bf16 %v189, %v189
  %v398 = vpack.c.bf16 %v190, %v190
  %v399 = vpack.c.bf16 %v191, %v191
  %v400 = vpack.c.bf16 %v192, %v192
  %v401 = vpack.c.bf16 %v193, %v193
  %v402 = vpack.c.bf16 %v194, %v194
  %v403 = vpack.c.bf16 %v195, %v195
  %v404 = vpack.c.bf16 %v196, %v196
  %v405 = vpack.c.bf16 %v197, %v197
  %v406 = vpack.c.bf16 %v198, %v198
  %v407 = vpack.c.bf16 %v199, %v199
  %v408 = vpack.c.bf16 %v200, %v200
  %v409 = vpack.c.bf16 %v201, %v201
  %v410 = vpack.c.bf16 %v202, %v202
  %v411 = vpack.c.bf16 %v203, %v203
  %v412 = vpack.c.bf16 %v204, %v204
  %v413 = vpack.c.bf16 %v205, %v205
  %v414 = vpack.c.bf16 %v206, %v206
  %v415 = vpack.c.bf16 %v207, %v207
  %v416 = vpack.c.bf16 %v208, %v208
  %v417 = vpack.c.bf16 %v209, %v209
  %v418 = vpack.c.bf16 %v210, %v210
  %v419 = vpack.c.bf16 %v211, %v211
  %v420 = vpack.c.bf16 %v212, %v212
  %v421 = vpack.c.bf16 %v213, %v213
  %v422 = vpack.c.bf16 %v214, %v214
  %v423 = vpack.c.bf16 %v215, %v215
  %v424 = vpack.c.bf16 %v216, %v216
  %v425 = vpack.c.bf16 %v217, %v217
  %v426 = vpack.c.bf16 %v218, %v218
  %427 = vst [vmem:[%s49] sm:$0xf] %v395
  %428 = vst [vmem:[%s49 + $0x4] sm:$0xf] %v396
  %429 = vst [vmem:[%s49 + $0x8] sm:$0xf] %v397
  %430 = vst [vmem:[%s49 + $0xc] sm:$0xf] %v398
  %431 = vst [vmem:[%s49 + $0x10] sm:$0xf] %v399
  %432 = vst [vmem:[%s49 + $0x14] sm:$0xf] %v400
  %433 = vst [vmem:[%s49 + $0x18] sm:$0xf] %v401
  %434 = vst [vmem:[%s49 + $0x1c] sm:$0xf] %v402
  %435 = vst [vmem:[%s49 + $0x20] sm:$0xf] %v403
  %436 = vst [vmem:[%s49 + $0x24] sm:$0xf] %v404
  %437 = vst [vmem:[%s49 + $0x28] sm:$0xf] %v405
  %438 = vst [vmem:[%s49 + $0x2c] sm:$0xf] %v406
  %439 = vst [vmem:[%s49 + $0x30] sm:$0xf] %v407
  %440 = vst [vmem:[%s49 + $0x34] sm:$0xf] %v408
  %441 = vst [vmem:[%s49 + $0x38] sm:$0xf] %v409
  %442 = vst [vmem:[%s49 + $0x3c] sm:$0xf] %v410
  %443 = vst [vmem:[%s49 + $0x40] sm:$0xf] %v411
  %444 = vst [vmem:[%s49 + $0x44] sm:$0xf] %v412
  %445 = vst [vmem:[%s49 + $0x48] sm:$0xf] %v413
  %446 = vst [vmem:[%s49 + $0x4c] sm:$0xf] %v414
  %447 = vst [vmem:[%s49 + $0x50] sm:$0xf] %v415
  %448 = vst [vmem:[%s49 + $0x54] sm:$0xf] %v416
  %449 = vst [vmem:[%s49 + $0x58] sm:$0xf] %v417
  %450 = vst [vmem:[%s49 + $0x5c] sm:$0xf] %v418
  %451 = vst [vmem:[%s49 + $0x60] sm:$0xf] %v419
  %452 = vst [vmem:[%s49 + $0x64] sm:$0xf] %v420
  %453 = vst [vmem:[%s49 + $0x68] sm:$0xf] %v421
  %454 = vst [vmem:[%s49 + $0x6c] sm:$0xf] %v422
  %455 = vst [vmem:[%s49 + $0x70] sm:$0xf] %v423
  %456 = vst [vmem:[%s49 + $0x74] sm:$0xf] %v424
  %457 = vst [vmem:[%s49 + $0x78] sm:$0xf] %v425
  %458 = vst [vmem:[%s49 + $0x7c] sm:$0xf] %v426
  %s459 = sadd.s32 0, 0
  %s460 = smul.u32 16, %s459
  %p461 = scmp.lt.s32.totalorder %s460, 15
  %s462 = scalar_select %p461, %s460, 15
  %s463 = smul.addr %s462, 2
  %s464 = smul.addr %s463, 4
  %s465 = scalar_lea.vmem %s3, %s464
  // Predicated region
  $region10: #{transition_forward.2} parent=0 // pred_check
    _
  $region11: #{transition_forward.2} parent=0 // pred_check_branch
    %467 = sbr.rel (0) target = $region13
  $region12: #{transition_forward.2} parent=0 // pred_region
    _
  $region13: #{transition_forward.2} parent=0 // pred_fallthru
    _
  // Predicated region
  $region14: #{transition_forward.2} parent=0 // pred_check
    _
  $region15: #{transition_forward.2} parent=0 // pred_check_branch
    %469 = sbr.rel (0) target = $region17
  $region16: #{transition_forward.2} parent=0 // pred_region
    _
  $region17: #{transition_forward.2} parent=0 // pred_fallthru
    _
  // Predicated region
  $region18: #{transition_forward.2} parent=0 // pred_check
    _
  $region19: #{transition_forward.2} parent=0 // pred_check_branch
    %471 = sbr.rel (0) target = $region21
  $region20: #{transition_forward.2} parent=0 // pred_region
    %s472 = sadd.s32 0, 0
    %s473 = smul.u32 16, %s472
  $region21: #{transition_forward.2} parent=0 // pred_fallthru
    _
  // Predicated region
  $region22: #{transition_forward.2} parent=0 // pred_check
    _
  $region23: #{transition_forward.2} parent=0 // pred_check_branch
    %475 = sbr.rel (0) target = $region25
  $region24: #{transition_forward.2} parent=0 // pred_region
    _
  $region25: #{transition_forward.2} parent=0 // pred_fallthru
    _
  // Predicated region
  $region26: #{transition_forward.2} parent=0 // pred_check
    _
  $region27: #{transition_forward.2} parent=0 // pred_check_branch
    %477 = sbr.rel (0) target = $region29
  $region28: #{transition_forward.2} parent=0 // pred_region
    _
  $region29: #{transition_forward.2} parent=0 // pred_fallthru
    _
  // Predicated region
  $region30: #{transition_forward.2} parent=0 // pred_check
    _
  $region31: #{transition_forward.2} parent=0 // pred_check_branch
    %479 = sbr.rel (0) target = $region33
  $region32: #{transition_forward.2} parent=0 // pred_region
    %s480 = sadd.s32 0, 0
    %s481 = smul.u32 16, %s480
    %p482 = scmp.lt.s32.totalorder %s481, 15
    %s483 = scalar_select %p482, %s481, 15
    %s484 = smul.addr %s483, 2
    %s485 = smul.addr %s484, 4
    %s486 = scalar_lea.vmem %s3, %s485
  $region33: #{transition_forward.2} parent=0 // pred_fallthru
    _

// kernel: transition_forward.3
$region0: #{transition_forward.3}
  #allocation0 [shape = 'u32[]', space=smem, size = 0x4, offset = 0x4, fixed_abs, tag = 'smem constant byte address 0x4 - core index']
  #allocation1 [shape = 'u32[72,128]{1,0:T(1,128)}', space=vmem, size = 0x9000, scoped, tag = 'internal scratch']
  %s0 = inlined_call_operand.vmem [shape: bf16[128,256], index: 0, kind: input, shape index: {}]
  %s1 = inlined_call_operand.vmem [shape: bf16[256,128], index: 1, kind: input, shape index: {}]
  %s2 = inlined_call_operand.vmem [shape: f32[1,128], index: 2, kind: input, shape index: {}]
  %s3 = inlined_call_operand.vmem [shape: f32[128,128], index: 3, kind: output, shape index: {}]
  %s4 = sld [smem:[#allocation0]]
  $region22: #{transition_forward.3} parent=0
    _
  %s6 = ssub.s32 1, %s4
  %s7 = scalar_select 0, %s6, %s4
  // Predicated region
  $region2: #{transition_forward.3} parent=0 // pred_check
    _
  $region3: #{transition_forward.3} parent=0 // pred_check_branch
    %9 = sbr.rel (0) target = $region5
  $region4: #{transition_forward.3} parent=0 // pred_region
    _
  $region5: #{transition_forward.3} parent=0 // pred_fallthru
    _
  // Predicated region
  $region6: #{transition_forward.3} parent=0 // pred_check
    _
  $region7: #{transition_forward.3} parent=0 // pred_check_branch
    %11 = sbr.rel (0) target = $region9
  $region8: #{transition_forward.3} parent=0 // pred_region
    _
  $region9: #{transition_forward.3} parent=0 // pred_fallthru
    _
  // Predicated region
  $region10: #{transition_forward.3} parent=0 // pred_check
    _
  $region11: #{transition_forward.3} parent=0 // pred_check_branch
    %13 = sbr.rel (0) target = $region13
  $region12: #{transition_forward.3} parent=0 // pred_region
    _
  $region13: #{transition_forward.3} parent=0 // pred_fallthru
    _
  %v14 = vld [vmem:[%s0] sm:$0xff]
  %v15 = vld [vmem:[%s0 + $0x8] sm:$0xff]
  %v16 = vld [vmem:[%s0 + $0x10] sm:$0xff]
  %v17 = vld [vmem:[%s0 + $0x18] sm:$0xff]
  %v18 = vld [vmem:[%s0 + $0x20] sm:$0xff]
  %v19 = vld [vmem:[%s0 + $0x28] sm:$0xff]
  %v20 = vld [vmem:[%s0 + $0x30] sm:$0xff]
  %v21 = vld [vmem:[%s0 + $0x38] sm:$0xff]
  %v22 = vld [vmem:[%s0 + $0x40] sm:$0xff]
  %v23 = vld [vmem:[%s0 + $0x48] sm:$0xff]
  %v24 = vld [vmem:[%s0 + $0x50] sm:$0xff]
  %v25 = vld [vmem:[%s0 + $0x58] sm:$0xff]
  %v26 = vld [vmem:[%s0 + $0x60] sm:$0xff]
  %v27 = vld [vmem:[%s0 + $0x68] sm:$0xff]
  %v28 = vld [vmem:[%s0 + $0x70] sm:$0xff]
  %v29 = vld [vmem:[%s0 + $0x78] sm:$0xff]
  %v30 = vld [vmem:[%s1] sm:$0xf]
  %v31 = vld [vmem:[%s1 + $0x4] sm:$0xf]
  %v32 = vld [vmem:[%s1 + $0x8] sm:$0xf]
  %v33 = vld [vmem:[%s1 + $0xc] sm:$0xf]
  %v34 = vld [vmem:[%s1 + $0x10] sm:$0xf]
  %v35 = vld [vmem:[%s1 + $0x14] sm:$0xf]
  %v36 = vld [vmem:[%s1 + $0x18] sm:$0xf]
  %v37 = vld [vmem:[%s1 + $0x1c] sm:$0xf]
  %v38 = vld [vmem:[%s1 + $0x20] sm:$0xf]
  %v39 = vld [vmem:[%s1 + $0x24] sm:$0xf]
  %v40 = vld [vmem:[%s1 + $0x28] sm:$0xf]
  %v41 = vld [vmem:[%s1 + $0x2c] sm:$0xf]
  %v42 = vld [vmem:[%s1 + $0x30] sm:$0xf]
  %v43 = vld [vmem:[%s1 + $0x34] sm:$0xf]
  %v44 = vld [vmem:[%s1 + $0x38] sm:$0xf]
  %v45 = vld [vmem:[%s1 + $0x3c] sm:$0xf]
  %v46 = vld [vmem:[%s1 + $0x40] sm:$0xf]
  %v47 = vld [vmem:[%s1 + $0x44] sm:$0xf]
  %v48 = vld [vmem:[%s1 + $0x48] sm:$0xf]
  %v49 = vld [vmem:[%s1 + $0x4c] sm:$0xf]
  %v50 = vld [vmem:[%s1 + $0x50] sm:$0xf]
  %v51 = vld [vmem:[%s1 + $0x54] sm:$0xf]
  %v52 = vld [vmem:[%s1 + $0x58] sm:$0xf]
  %v53 = vld [vmem:[%s1 + $0x5c] sm:$0xf]
  %v54 = vld [vmem:[%s1 + $0x60] sm:$0xf]
  %v55 = vld [vmem:[%s1 + $0x64] sm:$0xf]
  %v56 = vld [vmem:[%s1 + $0x68] sm:$0xf]
  %v57 = vld [vmem:[%s1 + $0x6c] sm:$0xf]
  %v58 = vld [vmem:[%s1 + $0x70] sm:$0xf]
  %v59 = vld [vmem:[%s1 + $0x74] sm:$0xf]
  %v60 = vld [vmem:[%s1 + $0x78] sm:$0xf]
  %v61 = vld [vmem:[%s1 + $0x7c] sm:$0xf]
  %v62 = vld [vmem:[%s2] sm:$0x1]
  %v64 = vperm.slane %v62, 0
  %v82 = vunpack.c.l.b16 %v14
  %v83 = vunpack.c.h.b16 %v14
  %v84 = vunpack.c.l.b16 %v15
  %v85 = vunpack.c.h.b16 %v15
  %v86 = vunpack.c.l.b16 %v16
  %v87 = vunpack.c.h.b16 %v16
  %v88 = vunpack.c.l.b16 %v17
  %v89 = vunpack.c.h.b16 %v17
  %v90 = vunpack.c.l.b16 %v18
  %v91 = vunpack.c.h.b16 %v18
  %v92 = vunpack.c.l.b16 %v19
  %v93 = vunpack.c.h.b16 %v19
  %v94 = vunpack.c.l.b16 %v20
  %v95 = vunpack.c.h.b16 %v20
  %v96 = vunpack.c.l.b16 %v21
  %v97 = vunpack.c.h.b16 %v21
  %v98 = vunpack.c.l.b16 %v22
  %v99 = vunpack.c.h.b16 %v22
  %v100 = vunpack.c.l.b16 %v23
  %v101 = vunpack.c.h.b16 %v23
  %v102 = vunpack.c.l.b16 %v24
  %v103 = vunpack.c.h.b16 %v24
  %v104 = vunpack.c.l.b16 %v25
  %v105 = vunpack.c.h.b16 %v25
  %v106 = vunpack.c.l.b16 %v26
  %v107 = vunpack.c.h.b16 %v26
  %v108 = vunpack.c.l.b16 %v27
  %v109 = vunpack.c.h.b16 %v27
  %v110 = vunpack.c.l.b16 %v28
  %v111 = vunpack.c.h.b16 %v28
  %v112 = vunpack.c.l.b16 %v29
  %v113 = vunpack.c.h.b16 %v29
  %v114 = vpack.c.b16 %v84, %v82
  %v115 = vpack.c.b16 %v85, %v83
  %v116 = vpack.c.b16 %v88, %v86
  %v117 = vpack.c.b16 %v89, %v87
  %v118 = vpack.c.b16 %v92, %v90
  %v119 = vpack.c.b16 %v93, %v91
  %v120 = vpack.c.b16 %v96, %v94
  %v121 = vpack.c.b16 %v97, %v95
  %v122 = vpack.c.b16 %v100, %v98
  %v123 = vpack.c.b16 %v101, %v99
  %v124 = vpack.c.b16 %v104, %v102
  %v125 = vpack.c.b16 %v105, %v103
  %v126 = vpack.c.b16 %v108, %v106
  %v127 = vpack.c.b16 %v109, %v107
  %v128 = vpack.c.b16 %v112, %v110
  %v129 = vpack.c.b16 %v113, %v111
  %v178 = vunpack.c.l.b16 %v30
  %v179 = vunpack.c.l.b16 %v31
  %v180 = vunpack.c.l.b16 %v32
  %v181 = vunpack.c.l.b16 %v33
  %v182 = vunpack.c.l.b16 %v34
  %v183 = vunpack.c.l.b16 %v35
  %v184 = vunpack.c.l.b16 %v36
  %v185 = vunpack.c.l.b16 %v37
  %v186 = vunpack.c.l.b16 %v38
  %v187 = vunpack.c.l.b16 %v39
  %v188 = vunpack.c.l.b16 %v40
  %v189 = vunpack.c.l.b16 %v41
  %v190 = vunpack.c.l.b16 %v42
  %v191 = vunpack.c.l.b16 %v43
  %v192 = vunpack.c.l.b16 %v44
  %v193 = vunpack.c.l.b16 %v45
  %v194 = vunpack.c.l.b16 %v46
  %v195 = vunpack.c.l.b16 %v47
  %v196 = vunpack.c.l.b16 %v48
  %v197 = vunpack.c.l.b16 %v49
  %v198 = vunpack.c.l.b16 %v50
  %v199 = vunpack.c.l.b16 %v51
  %v200 = vunpack.c.l.b16 %v52
  %v201 = vunpack.c.l.b16 %v53
  %v202 = vunpack.c.l.b16 %v54
  %v203 = vunpack.c.l.b16 %v55
  %v204 = vunpack.c.l.b16 %v56
  %v205 = vunpack.c.l.b16 %v57
  %v206 = vunpack.c.l.b16 %v58
  %v207 = vunpack.c.l.b16 %v59
  %v208 = vunpack.c.l.b16 %v60
  %v209 = vunpack.c.l.b16 %v61
  %v210 = vpack.c.b16 %v179, %v178
  %v211 = vpack.c.b16 %v181, %v180
  %v212 = vpack.c.b16 %v183, %v182
  %v213 = vpack.c.b16 %v185, %v184
  %v214 = vpack.c.b16 %v187, %v186
  %v215 = vpack.c.b16 %v189, %v188
  %v216 = vpack.c.b16 %v191, %v190
  %v217 = vpack.c.b16 %v193, %v192
  %v218 = vpack.c.b16 %v195, %v194
  %v219 = vpack.c.b16 %v197, %v196
  %v220 = vpack.c.b16 %v199, %v198
  %v221 = vpack.c.b16 %v201, %v200
  %v222 = vpack.c.b16 %v203, %v202
  %v223 = vpack.c.b16 %v205, %v204
  %v224 = vpack.c.b16 %v207, %v206
  %v225 = vpack.c.b16 %v209, %v208
  %242 = vmatpush.bf16.msra.mxu0 %v217
  %243 = vmatpush.bf16.msra.mxu0 %v216
  %244 = vmatpush.bf16.msra.mxu0 %v215
  %245 = vmatpush.bf16.msra.mxu0 %v214
  %246 = vmatpush.bf16.msra.mxu0 %v213
  %247 = vmatpush.bf16.msra.mxu0 %v212
  %248 = vmatpush.bf16.msra.mxu0 %v211
  %249 = vmatpush.bf16.msra.mxu0 %v210
  %250 = vmatmul.bf16.gmra.mxu0 %v114
  %v251 = vpop.f32.mrf.mxu0
  %v252 = vadd.f32 %v64, %v251
  %v253 = vpop.f32.mrf.mxu0
  %v254 = vadd.f32 %v64, %v253
  %255 = vmatmul.bf16.gmra.mxu0 %v116
  %v256 = vpop.f32.mrf.mxu0
  %v257 = vadd.f32 %v64, %v256
  %v258 = vpop.f32.mrf.mxu0
  %v259 = vadd.f32 %v64, %v258
  %260 = vmatmul.bf16.gmra.mxu0 %v118
  %v261 = vpop.f32.mrf.mxu0
  %v262 = vadd.f32 %v64, %v261
  %v263 = vpop.f32.mrf.mxu0
  %v264 = vadd.f32 %v64, %v263
  %265 = vmatmul.bf16.gmra.mxu0 %v120
  %v266 = vpop.f32.mrf.mxu0
  %v267 = vadd.f32 %v64, %v266
  %v268 = vpop.f32.mrf.mxu0
  %v269 = vadd.f32 %v64, %v268
  %270 = vmatmul.bf16.gmra.mxu0 %v122
  %v271 = vpop.f32.mrf.mxu0
  %v272 = vadd.f32 %v64, %v271
  %v273 = vpop.f32.mrf.mxu0
  %v274 = vadd.f32 %v64, %v273
  %275 = vmatmul.bf16.gmra.mxu0 %v124
  %v276 = vpop.f32.mrf.mxu0
  %v277 = vadd.f32 %v64, %v276
  %v278 = vpop.f32.mrf.mxu0
  %v279 = vadd.f32 %v64, %v278
  %280 = vmatmul.bf16.gmra.mxu0 %v126
  %v281 = vpop.f32.mrf.mxu0
  %v282 = vadd.f32 %v64, %v281
  %v283 = vpop.f32.mrf.mxu0
  %v284 = vadd.f32 %v64, %v283
  %285 = vmatmul.bf16.gmra.mxu0 %v128
  %v286 = vpop.f32.mrf.mxu0
  %v287 = vadd.f32 %v64, %v286
  %v288 = vpop.f32.mrf.mxu0
  %v289 = vadd.f32 %v64, %v288
  %290 = vdwg.mxu0
  %291 = vmatpush.bf16.msra.mxu0 %v225
  %292 = vmatpush.bf16.msra.mxu0 %v224
  %293 = vmatpush.bf16.msra.mxu0 %v223
  %294 = vmatpush.bf16.msra.mxu0 %v222
  %295 = vmatpush.bf16.msra.mxu0 %v221
  %296 = vmatpush.bf16.msra.mxu0 %v220
  %297 = vmatpush.bf16.msra.mxu0 %v219
  %298 = vmatpush.bf16.msra.mxu0 %v218
  %299 = vmatmul.bf16.gmra.mxu0 %v115
  %v300 = vpop.f32.mrf.mxu0
  %v301 = vadd.f32 %v252, %v300
  %v302 = vpop.f32.mrf.mxu0
  %v303 = vadd.f32 %v254, %v302
  %304 = vmatmul.bf16.gmra.mxu0 %v117
  %v305 = vpop.f32.mrf.mxu0
  %v306 = vadd.f32 %v257, %v305
  %v307 = vpop.f32.mrf.mxu0
  %v308 = vadd.f32 %v259, %v307
  %309 = vmatmul.bf16.gmra.mxu0 %v119
  %v310 = vpop.f32.mrf.mxu0
  %v311 = vadd.f32 %v262, %v310
  %v312 = vpop.f32.mrf.mxu0
  %v313 = vadd.f32 %v264, %v312
  %314 = vmatmul.bf16.gmra.mxu0 %v121
  %v315 = vpop.f32.mrf.mxu0
  %v316 = vadd.f32 %v267, %v315
  %v317 = vpop.f32.mrf.mxu0
  %v318 = vadd.f32 %v269, %v317
  %319 = vmatmul.bf16.gmra.mxu0 %v123
  %v320 = vpop.f32.mrf.mxu0
  %v321 = vadd.f32 %v272, %v320
  %v322 = vpop.f32.mrf.mxu0
  %v323 = vadd.f32 %v274, %v322
  %324 = vmatmul.bf16.gmra.mxu0 %v125
  %v325 = vpop.f32.mrf.mxu0
  %v326 = vadd.f32 %v277, %v325
  %v327 = vpop.f32.mrf.mxu0
  %v328 = vadd.f32 %v279, %v327
  %329 = vmatmul.bf16.gmra.mxu0 %v127
  %v330 = vpop.f32.mrf.mxu0
  %v331 = vadd.f32 %v282, %v330
  %v332 = vpop.f32.mrf.mxu0
  %v333 = vadd.f32 %v284, %v332
  %334 = vmatmul.bf16.gmra.mxu0 %v129
  %v335 = vpop.f32.mrf.mxu0
  %v336 = vadd.f32 %v287, %v335
  %v337 = vpop.f32.mrf.mxu0
  %v338 = vadd.f32 %v289, %v337
  %339 = vdwg.mxu0
  %340 = vst [vmem:[%s3] sm:$0xff] %v301
  %341 = vst [vmem:[%s3 + $0x8] sm:$0xff] %v303
  %342 = vst [vmem:[%s3 + $0x10] sm:$0xff] %v306
  %343 = vst [vmem:[%s3 + $0x18] sm:$0xff] %v308
  %344 = vst [vmem:[%s3 + $0x20] sm:$0xff] %v311
  %345 = vst [vmem:[%s3 + $0x28] sm:$0xff] %v313
  %346 = vst [vmem:[%s3 + $0x30] sm:$0xff] %v316
  %347 = vst [vmem:[%s3 + $0x38] sm:$0xff] %v318
  %348 = vst [vmem:[%s3 + $0x40] sm:$0xff] %v321
  %349 = vst [vmem:[%s3 + $0x48] sm:$0xff] %v323
  %350 = vst [vmem:[%s3 + $0x50] sm:$0xff] %v326
  %351 = vst [vmem:[%s3 + $0x58] sm:$0xff] %v328
  %352 = vst [vmem:[%s3 + $0x60] sm:$0xff] %v331
  %353 = vst [vmem:[%s3 + $0x68] sm:$0xff] %v333
  %354 = vst [vmem:[%s3 + $0x70] sm:$0xff] %v336
  %355 = vst [vmem:[%s3 + $0x78] sm:$0xff] %v338
  // Predicated region
  $region14: #{transition_forward.3} parent=0 // pred_check
    _
  $region15: #{transition_forward.3} parent=0 // pred_check_branch
    %357 = sbr.rel (0) target = $region17
  $region16: #{transition_forward.3} parent=0 // pred_region
    _
  $region17: #{transition_forward.3} parent=0 // pred_fallthru
    _
  // Predicated region
  $region18: #{transition_forward.3} parent=0 // pred_check
    _
  $region19: #{transition_forward.3} parent=0 // pred_check_branch
    %359 = sbr.rel (0) target = $region21
  $region20: #{transition_forward.3} parent=0 // pred_region
    _
  $region21: #{transition_forward.3} parent=0 // pred_fallthru
    _

</llo_original>
